<compile_context>
chip_gen: v7x
topology: tpu7x:2x2x1
jax: 0.10.0
libtpu: 0.0.40
codegen_flags: <defaults>
</compile_context>

<pallas_src>
import math

import jax
import jax.numpy as jnp
from jax import lax
from jax.experimental import pallas as pl
from jax.experimental.pallas import tpu as pltpu


def _projective_projection_kernel(x_ref, w_ref, b_ref, o_ref):
    # x_ref: (TM, D_in)   w_ref: (D_out, D_in)  [torch layout, no transpose]
    # b_ref: (1, D_out)   o_ref: (TM, D_out)
    x = x_ref[...]
    w = w_ref[...]
    b = b_ref[...].astype(jnp.float32)

    # y[m, o] = sum_k x[m, k] * w[o, k]   (MXU, f32 accumulation)
    y = lax.dot_general(
        x, w,
        dimension_numbers=(((1,), (1,)), ((), ())),
        preferred_element_type=jnp.float32,
    ) + b

    # Row-wise L2 norm, torch semantics: divide by (norm + 1e-8).
    sq = jnp.sum(y * y, axis=-1, keepdims=True)
    norm = jnp.sqrt(sq)
    inv = pl.reciprocal(norm + 1e-8)          # exact; keeps 1e-5 tolerance
    o_ref[...] = (y * inv).astype(o_ref.dtype)


def _round_up(x, n):
    return ((x + n - 1) // n) * n


def _choose_tile_m(m_padded, d_in, d_out, dtype_bytes, budget_bytes=24 << 20):
    """Largest TM (multiple of 8, <=1024) whose double-buffered tiles fit budget."""
    per_row = 2 * d_in * dtype_bytes + 2 * d_out * dtype_bytes   # x + out, 2 bufs
    fixed = 2 * d_in * d_out * dtype_bytes + 2 * d_out * dtype_bytes  # W + b (x2 safe)
    avail = max(budget_bytes - fixed, 8 * per_row)
    tm = max(8, min(1024, avail // per_row))
    tm = max(8, (tm // 8) * 8)
    return min(tm, m_padded)


def projective_projection(x, weight, bias):
    """x: (..., D_in); weight: (D_out, D_in) [torch layout]; bias: (D_out,)."""
    *lead, d_in = x.shape
    d_out, d_in_w = weight.shape
    assert d_in_w == d_in, (d_in_w, d_in)

    m = 1
    for s in lead:
        m *= int(s)

    dtype = x.dtype
    dtype_bytes = jnp.dtype(dtype).itemsize

    m_padded8 = _round_up(max(m, 1), 8)
    tm = _choose_tile_m(m_padded8, d_in, d_out, dtype_bytes)
    m_padded = _round_up(m_padded8, tm)
    grid_m = m_padded // tm

    x2d = x.reshape(m, d_in)
    if m_padded != m:
        x2d = jnp.pad(x2d, ((0, m_padded - m), (0, 0)))
    b2d = bias.reshape(1, d_out)

    cost = pl.CostEstimate(
        flops=2 * m * d_in * d_out,
        transcendentals=m,
        bytes_accessed=(m * d_in + d_in * d_out + m * d_out) * dtype_bytes,
    )

    out2d = pl.pallas_call(
        _projective_projection_kernel,
        out_shape=jax.ShapeDtypeStruct((m_padded, d_out), dtype),
        grid_spec=pltpu.PrefetchScalarGridSpec(
            num_scalar_prefetch=0,
            grid=(grid_m,),
            in_specs=[
                pl.BlockSpec((tm, d_in), lambda i: (i, 0)),       # activations, tiled
                pl.BlockSpec((d_out, d_in), lambda i: (0, 0)),    # weight, VMEM-resident
                pl.BlockSpec((1, d_out), lambda i: (0, 0)),       # bias, VMEM-resident
            ],
            out_specs=pl.BlockSpec((tm, d_out), lambda i: (i, 0)),
        ),
        compiler_params=pltpu.CompilerParams(
            dimension_semantics=("parallel",),   # rows independent -> megacore-friendly
            vmem_limit_bytes=48 << 20,           # safe on v5e/v6e/v7x (64 MiB physical)
        ),
        cost_estimate=cost,
    )(x2d, weight, b2d)

    out2d = out2d[:m]
    return out2d.reshape(*lead, d_out)


if __name__ == "__main__":
    # Small shapes consistent with the module: batch=2, seq=8, hidden=32 -> 32
    B, S, D_IN, D_OUT = 2, 8, 32, 32

    key = jax.random.PRNGKey(0)
    kx, kw, kb = jax.random.split(key, 3)

    x = jax.random.normal(kx, (B, S, D_IN), dtype=jnp.float32)
    # Deterministic "nn.Linear"-style init (uniform in +/- 1/sqrt(D_IN))
    bound = 1.0 / math.sqrt(D_IN)
    weight = jax.random.uniform(kw, (D_OUT, D_IN), jnp.float32, -bound, bound)
    bias = jax.random.uniform(kb, (D_OUT,), jnp.float32, -bound, bound)

    out = projective_projection(x, weight, bias)
    jax.block_until_ready(out)

    # Reference check in plain JAX
    y_ref = x @ weight.T + bias
    ref = y_ref / (jnp.linalg.norm(y_ref, axis=-1, keepdims=True) + 1e-8)
    assert out.shape == (B, S, D_OUT)
    assert jnp.allclose(out, ref, atol=1e-5, rtol=1e-5), float(
        jnp.max(jnp.abs(out - ref)))

    print("KERNEL_OK")
</pallas_src>

<mosaic_0001>
module attributes {stable_mosaic.version = 11 : i64} {
  func.func @_projective_projection_kernel(%arg0: i32, %arg1: memref<16x32xf32, #tpu.memory_space<vmem>>, %arg2: memref<32x32xf32, #tpu.memory_space<vmem>>, %arg3: memref<1x32xf32, #tpu.memory_space<vmem>>, %arg4: memref<16x32xf32, #tpu.memory_space<vmem>>) attributes {dimension_semantics = [#tpu.dimension_semantics<parallel>], iteration_bounds = array<i64: 1>, scalar_prefetch = 0 : i64, scratch_operands = 0 : i64, tpu.core_type = #tpu.core_type<tc>, window_params = [{transform_indices = @transform_0, window_bounds = array<i64: 16, 32>}, {pipeline_mode = #tpu.pipeline_mode<synchronous>, transform_indices = @transform_1, window_bounds = array<i64: 32, 32>}, {pipeline_mode = #tpu.pipeline_mode<synchronous>, transform_indices = @transform_2, window_bounds = array<i64: 1, 32>}, {transform_indices = @transform_3, window_bounds = array<i64: 16, 32>}]} {
    %c0 = arith.constant 0 : index
    %c0_0 = arith.constant 0 : index
    %0 = vector.load %arg1[%c0, %c0_0] : memref<16x32xf32, #tpu.memory_space<vmem>>, vector<16x32xf32>
    %c0_1 = arith.constant 0 : index
    %c0_2 = arith.constant 0 : index
    %1 = vector.load %arg2[%c0_1, %c0_2] : memref<32x32xf32, #tpu.memory_space<vmem>>, vector<32x32xf32>
    %c0_3 = arith.constant 0 : index
    %c0_4 = arith.constant 0 : index
    %2 = vector.load %arg3[%c0_3, %c0_4] : memref<1x32xf32, #tpu.memory_space<vmem>>, vector<1x32xf32>
    %cst = arith.constant dense<0.000000e+00> : vector<16x32xf32>
    %3 = tpu.matmul %0, %1, %cst {dimension_numbers = #tpu.dot_dimension_numbers<[1], [1], [0], [0], [0, 0, 1, 0], [], []>} : vector<16x32xf32>, vector<32x32xf32>, vector<16x32xf32> -> vector<16x32xf32>
    %4 = vector.broadcast %2 : vector<1x32xf32> to vector<16x32xf32>
    %5 = arith.addf %3, %4 : vector<16x32xf32>
    %6 = arith.mulf %5, %5 : vector<16x32xf32>
    %cst_5 = arith.constant dense<0.000000e+00> : vector<16xf32>
    %7 = vector.multi_reduction <add>, %6, %cst_5 [1] : vector<16x32xf32> to vector<16xf32>
    %8 = vector.shape_cast %7 : vector<16xf32> to vector<16x1xf32>
    %9 = math.sqrt %8 : vector<16x1xf32>
    %cst_6 = arith.constant 9.99999993E-9 : f32
    %10 = vector.broadcast %cst_6 : f32 to vector<16x1xf32>
    %11 = arith.addf %9, %10 : vector<16x1xf32>
    %12 = tpu.reciprocal %11 : vector<16x1xf32> -> vector<16x1xf32>
    %13 = vector.broadcast %12 : vector<16x1xf32> to vector<16x32xf32>
    %14 = arith.mulf %5, %13 : vector<16x32xf32>
    %c0_7 = arith.constant 0 : index
    %c0_8 = arith.constant 0 : index
    %15 = vector.load %arg4[%c0_7, %c0_8] : memref<16x32xf32, #tpu.memory_space<vmem>>, vector<16x32xf32>
    tpu.vector_store %arg4[%c0_7, %c0_8], %14 {strides = array<i32>} : memref<16x32xf32, #tpu.memory_space<vmem>>, vector<16x32xf32>,
    return
  }
  func.func @transform_0(%arg0: i32) -> (i32, i32) {
    %c0_i32 = arith.constant 0 : i32
    %c0_i32_0 = arith.constant 0 : i32
    return %arg0, %c0_i32 : i32, i32
  }
  func.func @transform_1(%arg0: i32) -> (i32, i32) {
    %c0_i32 = arith.constant 0 : i32
    %c0_i32_0 = arith.constant 0 : i32
    %c0_i32_1 = arith.constant 0 : i32
    return %c0_i32, %c0_i32_0 : i32, i32
  }
  func.func @transform_2(%arg0: i32) -> (i32, i32) {
    %c0_i32 = arith.constant 0 : i32
    %c0_i32_0 = arith.constant 0 : i32
    %c0_i32_1 = arith.constant 0 : i32
    return %c0_i32, %c0_i32_0 : i32, i32
  }
  func.func @transform_3(%arg0: i32) -> (i32, i32) {
    %c0_i32 = arith.constant 0 : i32
    %c0_i32_0 = arith.constant 0 : i32
    return %arg0, %c0_i32 : i32, i32
  }
}

</mosaic_0001>

<llo_original>
// kernel: tpu_custom_call.1
$region0: #{tpu_custom_call.1}
  #allocation0 [shape = 'u32[]', space=smem, size = 0x4, offset = 0x4, fixed_abs, tag = 'smem constant byte address 0x4 - core index']
  #allocation1 [shape = 'u32[144,128]{1,0:T(1,128)}', space=vmem, size = 0x12000, scoped, tag = 'internal scratch']
  %s0 = inlined_call_operand.hbm [shape: f32[16,32], index: 0, kind: input, shape index: {}]
  %s1 = inlined_call_operand.hbm [shape: f32[32,32], index: 1, kind: input, shape index: {}]
  %s2 = inlined_call_operand.vmem [shape: f32[1,32], index: 2, kind: input, shape index: {}]
  %s3 = inlined_call_operand.hbm [shape: f32[16,32], index: 3, kind: output, shape index: {}]
  %s4 = sld [smem:[#allocation0]]
  $region30: #{tpu_custom_call.1} parent=0
    _
  %s6 = ssub.s32 1, %s4
  %s7 = scalar_select 0, %s6, %s4
  $region1: #{tpu_custom_call.1} parent=0
    #allocation2 [shape = 'u8[8192]{0}', space=vmem, size = 0x2000, scoped, tag = 'input window, operand 0, single buffered']
    #allocation3 [shape = 's32[1]{0}', space=sflag, size = 0x4, scoped, tag = 'scoped memory for tpu_custom_call.1']
    #allocation4 [shape = 's32[1]{0}', space=sflag, size = 0x4, scoped, tag = 'scoped memory for tpu_custom_call.1']
    #allocation5 [shape = 'u8[16384]{0}', space=vmem, size = 0x4000, scoped, tag = 'input window, operand 1, single buffered']
    #allocation6 [shape = 's32[1]{0}', space=sflag, size = 0x4, scoped, tag = 'scoped memory for tpu_custom_call.1']
    #allocation7 [shape = 'u8[8192]{0}', space=vmem, size = 0x2000, scoped, tag = 'output window, operand 0, single buffered']
    %8 = vsyncpa [#allocation3], 0
    %9 = vsyncpa [#allocation6], 0
    %10 = vsyncpa [#allocation4], 0
    // Predicated region
    $region2: #{tpu_custom_call.1} parent=1 // pred_check
      _
    $region3: #{tpu_custom_call.1} parent=1 // pred_check_branch
      %12 = sbr.rel (0) target = $region5
    $region4: #{tpu_custom_call.1} parent=1 // pred_region
      %s14 = ssub.s32 256, 256
      %15 = vsyncadd [#allocation3], %s14
      %s16 = sshll.u32 [#allocation2], 4
      %s17 = int_to_ptr.vmem [resolvable:$true] %s16
      %22 = dma.hbm_to_vmem [thread:$0]  %s0, 256, %s17, [#allocation3], 128, 128, 8
    $region5: #{tpu_custom_call.1} parent=1 // pred_fallthru
      _
    // Predicated region
    $region6: #{tpu_custom_call.1} parent=1 // pred_check
      _
    $region7: #{tpu_custom_call.1} parent=1 // pred_check_branch
      %24 = sbr.rel (0) target = $region9
    $region8: #{tpu_custom_call.1} parent=1 // pred_region
      %s26 = ssub.s32 512, 512
      %27 = vsyncadd [#allocation6], %s26
      %s28 = sshll.u32 [#allocation5], 4
      %s29 = int_to_ptr.vmem [resolvable:$true] %s28
      %34 = dma.hbm_to_vmem [thread:$0]  %s1, 512, %s29, [#allocation6], 128, 128, 8
    $region9: #{tpu_custom_call.1} parent=1 // pred_fallthru
      _
    // Predicated region
    $region10: #{tpu_custom_call.1} parent=1 // pred_check
      _
    $region11: #{tpu_custom_call.1} parent=1 // pred_check_branch
      %36 = sbr.rel (0) target = $region13
    $region12: #{tpu_custom_call.1} parent=1 // pred_region
      _
    $region13: #{tpu_custom_call.1} parent=1 // pred_fallthru
      _
    // Predicated region
    $region14: #{tpu_custom_call.1} parent=1 // pred_check
      _
    $region15: #{tpu_custom_call.1} parent=1 // pred_check_branch
      %38 = sbr.rel (0) target = $region17
    $region16: #{tpu_custom_call.1} parent=1 // pred_region
      %39 = dma.done [#allocation3], 256
    $region17: #{tpu_custom_call.1} parent=1 // pred_fallthru
      _
    // Predicated region
    $region18: #{tpu_custom_call.1} parent=1 // pred_check
      _
    $region19: #{tpu_custom_call.1} parent=1 // pred_check_branch
      %41 = sbr.rel (0) target = $region21
    $region20: #{tpu_custom_call.1} parent=1 // pred_region
      %42 = dma.done [#allocation6], 512
    $region21: #{tpu_custom_call.1} parent=1 // pred_fallthru
      _
    %v43 = vld [vmem:[#allocation2] sm:$0xff]
    %v44 = vld [vmem:[#allocation2 + $0x8] sm:$0xff]
    %v45 = vld [vmem:[#allocation5] sm:$0xff]
    %v46 = vld [vmem:[#allocation5 + $0x8] sm:$0xff]
    %v47 = vld [vmem:[#allocation5 + $0x10] sm:$0xff]
    %v48 = vld [vmem:[#allocation5 + $0x18] sm:$0xff]
    %v49 = vld [vmem:[%s2] sm:$0x1]
    %v51 = vlaneseq
    %v52 = vshrl.u32 %v51, 7
    %v53 = vsub.s32 0, %v52
    %v54 = vrot.slane %v49, %v53
    %vm56 = vcmask 261120
    %v58 = vsel %vm56, %v43, 0
    %v61 = vsel %vm56, %v44, 0
    %v64 = vsel %vm56, %v45, 0
    %v67 = vsel %vm56, %v46, 0
    %v70 = vsel %vm56, %v47, 0
    %v73 = vsel %vm56, %v48, 0
    %75 = vmatprep.subr.mxu0 0.0
    %76 = vmatpush1.xpose.msra.mxu0 %v64
    %77 = vmatprep.subr.mxu0 0.0
    %78 = vmatpush1.xpose.msra.mxu0 %v67
    %79 = vmatprep.subr.mxu0 0.0
    %80 = vmatpush1.xpose.msra.mxu0 %v70
    %81 = vmatprep.subr.mxu0 0.0
    %82 = vmatpush1.xpose.msra.mxu0 %v73
    %83 = vmatprep.subr.mxu0 0.0
    %84 = vmatpush1.xpose.msra.mxu0 0.0
    %85 = vmatprep.subr.mxu0 0.0
    %86 = vmatpush1.xpose.msra.mxu0 0.0
    %87 = vmatprep.subr.mxu0 0.0
    %88 = vmatpush1.xpose.msra.mxu0 0.0
    %89 = vmatprep.subr.mxu0 0.0
    %90 = vmatpush1.xpose.msra.mxu0 0.0
    %91 = vmatprep.subr.mxu0 0.0
    %92 = vmatpush1.xpose.msra.mxu0 0.0
    %93 = vmatprep.subr.mxu0 0.0
    %94 = vmatpush1.xpose.msra.mxu0 0.0
    %95 = vmatprep.subr.mxu0 0.0
    %96 = vmatpush1.xpose.msra.mxu0 0.0
    %97 = vmatprep.subr.mxu0 0.0
    %98 = vmatpush1.xpose.msra.mxu0 0.0
    %99 = vmatprep.subr.mxu0 0.0
    %100 = vmatpush1.xpose.msra.mxu0 0.0
    %101 = vmatprep.subr.mxu0 0.0
    %102 = vmatpush1.xpose.msra.mxu0 0.0
    %103 = vmatprep.subr.mxu0 0.0
    %104 = vmatpush1.xpose.msra.mxu0 0.0
    %105 = vmatprep.subr.mxu0 0.0
    %106 = vmatpush1.xpose.msra.mxu0 0.0
    %107 = vmatprep.subr.mxu0 0.0
    %108 = vmatpush1.xpose.msra.mxu0 0.0
    %109 = vmatprep.subr.mxu0 0.0
    %110 = vmatpush1.xpose.msra.mxu0 0.0
    %111 = vmatprep.subr.mxu0 0.0
    %112 = vmatpush1.xpose.msra.mxu0 0.0
    %113 = vmatprep.subr.mxu0 0.0
    %114 = vmatpush1.xpose.msra.mxu0 0.0
    %115 = vmatprep.subr.mxu0 0.0
    %116 = vmatpush1.xpose.msra.mxu0 0.0
    %117 = vmatprep.subr.mxu0 0.0
    %118 = vmatpush1.xpose.msra.mxu0 0.0
    %119 = vmatprep.subr.mxu0 0.0
    %120 = vmatpush1.xpose.msra.mxu0 0.0
    %121 = vmatprep.subr.mxu0 0.0
    %122 = vmatpush1.xpose.msra.mxu0 0.0
    %123 = vmatprep.subr.mxu0 0.0
    %124 = vmatpush1.xpose.msra.mxu0 0.0
    %125 = vmatprep.subr.mxu0 0.0
    %126 = vmatpush1.xpose.msra.mxu0 0.0
    %127 = vmatprep.subr.mxu0 0.0
    %128 = vmatpush1.xpose.msra.mxu0 0.0
    %129 = vmatprep.subr.mxu0 0.0
    %130 = vmatpush1.xpose.msra.mxu0 0.0
    %131 = vmatprep.subr.mxu0 0.0
    %132 = vmatpush1.xpose.msra.mxu0 0.0
    %133 = vmatprep.subr.mxu0 0.0
    %134 = vmatpush1.xpose.msra.mxu0 0.0
    %135 = vmatprep.subr.mxu0 0.0
    %136 = vmatpush1.xpose.msra.mxu0 0.0
    %137 = vmatprep.subr.mxu0 0.0
    %138 = vmatpush1.xpose.msra.mxu0 0.0
    %139 = vmatprep.mubr.f32.mxu0 0.0
    %140 = vmatmul.mubr.f32.gmra.mrb[0].mxu0 %v58
    %v141 = vpop.f32.mrb[0].mxu0
    %v142 = vadd.f32 %v54, %v141
    %v143 = vpop.f32.mrb[0].mxu0
    %144 = vmatprep.mubr.f32.mxu0 0.0
    %145 = vmatmul.mubr.f32.gmra.mrb[0].mxu0 %v61
    %v146 = vpop.f32.mrb[0].mxu0
    %v147 = vadd.f32 %v54, %v146
    %v148 = vpop.f32.mrb[0].mxu0
    %149 = vdwg.mxu0
    %v150 = vmul.f32 %v142, %v142
    %v151 = vmul.f32 %v147, %v147
    %v152 = vsel %vm56, %v150, 0.0
    %153 = vadd.xlane.f32.xlu0 %v152
    %v154 = vpop.xlane.xlu0 %153
    %v155 = vsel %vm56, %v151, 0.0
    %156 = vadd.xlane.f32.xlu0 %v155
    %v157 = vpop.xlane.xlu0 %156
    %v158 = vrsqrt.pop %v154
    %v159 = vmul.f32 %v154, %v158
    %vm160 = vcmp.eq.f32.partialorder %v154, inf
    %v161 = vsel %vm160, %v154, %v159
    %vm162 = vcmp.eq.f32.partialorder %v154, 0.0
    %v163 = vand.u32 %v154, 2147483648
    %v164 = vsel %vm162, %v163, %v161
    %v165 = vrsqrt.pop %v157
    %v166 = vmul.f32 %v157, %v165
    %vm167 = vcmp.eq.f32.partialorder %v157, inf
    %v168 = vsel %vm167, %v157, %v166
    %vm169 = vcmp.eq.f32.partialorder %v157, 0.0
    %v170 = vand.u32 %v157, 2147483648
    %v171 = vsel %vm169, %v170, %v168
    %v172 = vadd.f32 %v164, 1e-08
    %v173 = vadd.f32 %v171, 1e-08
    %v174 = vrcp.pop %v172
    %v175 = vrcp.pop %v173
    %v176 = vmul.f32 %v142, %v174
    %v177 = vmul.f32 %v147, %v175
    %178 = vst.msk [vmem:[#allocation7] sm:$0xff] %vm56, %v176
    %179 = vst.msk [vmem:[#allocation7 + $0x8] sm:$0xff] %vm56, %v177
    // Predicated region
    $region22: #{tpu_custom_call.1} parent=1 // pred_check
      _
    $region23: #{tpu_custom_call.1} parent=1 // pred_check_branch
      %181 = sbr.rel (0) target = $region25
    $region24: #{tpu_custom_call.1} parent=1 // pred_region
      %s183 = ssub.s32 256, 256
      %184 = vsyncadd [#allocation4], %s183
      %s185 = sshll.u32 [#allocation7], 4
      %s186 = int_to_ptr.vmem [resolvable:$true] %s185
      %191 = dma.vmem_to_hbm [thread:$0]  %s186, 256, %s3, [#allocation4], 128, 128, 8
    $region25: #{tpu_custom_call.1} parent=1 // pred_fallthru
      _
    // Predicated region
    $region26: #{tpu_custom_call.1} parent=1 // pred_check
      _
    $region27: #{tpu_custom_call.1} parent=1 // pred_check_branch
      %193 = sbr.rel (0) target = $region29
    $region28: #{tpu_custom_call.1} parent=1 // pred_region
      %194 = dma.done [#allocation4], 256
    $region29: #{tpu_custom_call.1} parent=1 // pred_fallthru
      _
    %195 = vsyncpa [#allocation3], 1
    %196 = vsyncpa [#allocation6], 1
    %197 = vsyncpa [#allocation4], 1

</llo_original>
